<compile_context>
chip_gen: v7x
topology: tpu7x:2x2x1
jax: 0.10.0
libtpu: 0.0.40
codegen_flags: <defaults>
</compile_context>

<pallas_src>
import functools

import jax
import jax.numpy as jnp
from jax import lax
from jax.experimental import pallas as pl
from jax.experimental.pallas import tpu as pltpu


_LANES = 128
_VMEM_LIMIT_BYTES = 48 * 1024 * 1024   # <= v7x 64 MiB physical, > default scoped limits
_VMEM_TILE_BUDGET = 36 * 1024 * 1024   # budget for resident centers + streamed tiles
_ONEHOT_MAX_CLASSES = 1024             # above this the one-hot matmul wastes too much


def _masked_partial_sum(dist, i, tile_b, total_b):
    """Clamp per-row distances, zero padded rows of the final tile, reduce to scalar."""
    dist = jnp.clip(dist, 1e-12, 1e12)
    rows = lax.broadcasted_iota(jnp.int32, dist.shape, dimension=0)
    dist = jnp.where(i * tile_b + rows < total_b, dist, 0.0)
    return jnp.sum(dist)


def _center_loss_onehot_kernel(labels_ref, x_ref, centers_ref, out_ref, *, total_b, tile_b):
    """Small-C path: gather = one-hot matmul on the MXU (exact in f32 accumulation)."""
    i = pl.program_id(0)

    x = x_ref[...].astype(jnp.float32)          # (tile_b, D), f32 compute
    centers = centers_ref[...]                  # (C, D), native dtype (bf16 stays bf16 on MXU)
    labels = labels_ref[...]                    # (tile_b, 1), int32
    c = centers.shape[0]

    class_ids = lax.broadcasted_iota(jnp.int32, (tile_b, c), dimension=1)
    onehot = (labels == class_ids).astype(centers.dtype)     # exact for float dtypes
    center = jnp.dot(onehot, centers, preferred_element_type=jnp.float32)

    diff = x - center
    dist = jnp.sum(diff * diff, axis=-1, keepdims=True)      # (tile_b, 1), kept 2-D
    partial_sum = _masked_partial_sum(dist, i, tile_b, total_b)

    # Lane-dense (1, 1, 128) partial-sum block; wrapper reads [:, 0, 0].
    out_ref[...] = jnp.broadcast_to(partial_sum, (1, 1, _LANES)).astype(jnp.float32)


def _center_loss_gather_kernel(labels_sref, x_ref, centers_ref, out_ref, gathered_ref,
                               *, total_b, tile_b):
    """Large-C path: real gather via SMEM labels (scalar prefetch), O(B*D) work."""
    i = pl.program_id(0)
    c = centers_ref.shape[0]

    # Copy only the tile_b needed center rows into the f32 VMEM scratch.
    def gather_row(r, carry):
        idx = jnp.minimum(i * tile_b + r, total_b - 1)        # clamp padded rows
        lab = jnp.clip(labels_sref[idx], 0, c - 1)            # guard against bad labels
        gathered_ref[pl.ds(r, 1), :] = centers_ref[pl.ds(lab, 1), :].astype(jnp.float32)
        return carry

    lax.fori_loop(0, tile_b, gather_row, 0)

    x = x_ref[...].astype(jnp.float32)
    diff = x - gathered_ref[...]
    dist = jnp.sum(diff * diff, axis=-1, keepdims=True)
    partial_sum = _masked_partial_sum(dist, i, tile_b, total_b)
    out_ref[...] = jnp.broadcast_to(partial_sum, (1, 1, _LANES)).astype(jnp.float32)


def _row_multiple(x_itemsize):
    # bf16 packs two rows per sublane, 8-bit packs four: keep packed rows whole.
    return {4: 8, 2: 16, 1: 32}.get(int(x_itemsize), 8)


def _pick_tile_b(b, d, c, x_itemsize, centers_itemsize, use_gather):
    """Derive the batch tile from a generation-safe VMEM budget (not a fixed cap)."""
    row_mult = _row_multiple(x_itemsize)
    centers_bytes = 2 * c * d * centers_itemsize          # resident block, double-buffered
    per_row = 2 * d * x_itemsize                          # streamed x tile, double-buffered
    per_row += 2 * d * 4                                  # f32 diff / square intermediates
    if use_gather:
        per_row += d * 4                                  # gathered-centers f32 scratch
    else:
        per_row += 2 * 4                                  # (tile_b, 1) labels block
        per_row += c * (4 + centers_itemsize)             # one-hot intermediate
    avail = max(_VMEM_TILE_BUDGET - centers_bytes, row_mult * per_row)
    cap = min(4096, max(row_mult, avail // per_row))
    if b <= cap:
        return b
    return max(row_mult, (cap // row_mult) * row_mult)


def center_loss(x, labels, centers, *, tile_b=None, use_gather=None):
    """x: (B, D) float, labels: (B,) int, centers: (C, D) float -> scalar f32 loss."""
    b, d = x.shape
    c, d2 = centers.shape
    assert d == d2, (x.shape, centers.shape)
    assert jnp.issubdtype(centers.dtype, jnp.floating), "centers must be a float dtype"

    if use_gather is None:
        use_gather = c > _ONEHOT_MAX_CLASSES

    row_mult = _row_multiple(x.dtype.itemsize)
    if tile_b is None:
        tile_b = _pick_tile_b(b, d, c, x.dtype.itemsize, centers.dtype.itemsize, use_gather)
    if tile_b != b and tile_b % row_mult != 0:
        tile_b = max(row_mult, (tile_b // row_mult) * row_mult)
    tile_b = min(tile_b, b)
    num_tiles = pl.cdiv(b, tile_b)

    labels_i32 = labels.astype(jnp.int32)

    cost = pl.CostEstimate(
        flops=int((2 * b * c * d if not use_gather else 0) + 4 * b * d),
        transcendentals=0,
        bytes_accessed=int(b * d * x.dtype.itemsize + c * d * centers.dtype.itemsize
                           + b * 4 + num_tiles * _LANES * 4),
    )
    compiler_params = pltpu.CompilerParams(
        dimension_semantics=("parallel",),          # distinct output block per tile
        vmem_limit_bytes=_VMEM_LIMIT_BYTES,
    )
    out_shape = jax.ShapeDtypeStruct((num_tiles, 1, _LANES), jnp.float32)

    if use_gather:
        kernel = functools.partial(_center_loss_gather_kernel, total_b=b, tile_b=tile_b)
        grid_spec = pltpu.PrefetchScalarGridSpec(
            num_scalar_prefetch=1,                  # labels -> SMEM
            grid=(num_tiles,),
            in_specs=[
                pl.BlockSpec((tile_b, d), lambda i, lbl: (i, 0)),   # x: streamed tiles
                pl.BlockSpec((c, d), lambda i, lbl: (0, 0)),        # centers: VMEM-resident
            ],
            out_specs=pl.BlockSpec((1, 1, _LANES), lambda i, lbl: (i, 0, 0)),
            scratch_shapes=[pltpu.VMEM((tile_b, d), jnp.float32)],  # gathered center rows
        )
        partials = pl.pallas_call(
            kernel,
            out_shape=out_shape,
            grid_spec=grid_spec,
            compiler_params=compiler_params,
            cost_estimate=cost,
        )(labels_i32, x, centers)
    else:
        kernel = functools.partial(_center_loss_onehot_kernel, total_b=b, tile_b=tile_b)
        partials = pl.pallas_call(
            kernel,
            out_shape=out_shape,
            grid=(num_tiles,),
            in_specs=[
                pl.BlockSpec((tile_b, 1), lambda i: (i, 0)),        # labels: streamed with x
                pl.BlockSpec((tile_b, d), lambda i: (i, 0)),        # x: streamed tiles
                pl.BlockSpec((c, d), lambda i: (0, 0)),             # centers: VMEM-resident
            ],
            out_specs=pl.BlockSpec((1, 1, _LANES), lambda i: (i, 0, 0)),
            compiler_params=compiler_params,
            cost_estimate=cost,
        )(labels_i32.reshape(b, 1), x, centers)

    # Per-tile partial sums (broadcast across 128 lanes in-kernel); final mean here.
    return jnp.sum(partials[:, 0, 0]) / jnp.float32(b)


def center_loss_ref(x, labels, centers):
    center = centers[labels]
    dist = jnp.sum((x.astype(jnp.float32) - center.astype(jnp.float32)) ** 2, axis=-1)
    return jnp.mean(jnp.clip(dist, 1e-12, 1e12))


if __name__ == "__main__":
    num_class = 10
    num_feature = 2

    key = jax.random.PRNGKey(0)
    k_centers, k_x, k_labels, k_x2, k_l2 = jax.random.split(key, 5)

    # Deterministic parameter init (stand-in for torch.manual_seed(222) + randn).
    centers = jax.random.normal(k_centers, (num_class, num_feature), dtype=jnp.float32)

    # 1) Default (small-C one-hot) path, single tile.
    x1 = jax.random.normal(k_x, (8, num_feature), dtype=jnp.float32)
    l1 = jax.random.randint(k_labels, (8,), 0, num_class, dtype=jnp.int32)
    out1 = jax.block_until_ready(center_loss(x1, l1, centers))
    ref1 = jax.block_until_ready(center_loss_ref(x1, l1, centers))
    assert jnp.allclose(out1, ref1, rtol=1e-5, atol=1e-6), (out1, ref1)

    # 2) One-hot path, multi-tile with a padded final tile (B=20, tile_b=8).
    x2 = jax.random.normal(k_x2, (20, num_feature), dtype=jnp.float32)
    l2 = jax.random.randint(k_l2, (20,), 0, num_class, dtype=jnp.int32)
    out2 = jax.block_until_ready(center_loss(x2, l2, centers, tile_b=8))
    ref2 = jax.block_until_ready(center_loss_ref(x2, l2, centers))
    assert jnp.allclose(out2, ref2, rtol=1e-5, atol=1e-6), (out2, ref2)

    # 3) Forced real-gather (scalar-prefetch) path on the same data.
    out3 = jax.block_until_ready(center_loss(x2, l2, centers, tile_b=8, use_gather=True))
    assert jnp.allclose(out3, ref2, rtol=1e-5, atol=1e-6), (out3, ref2)

    # 4) bf16 activations exercise the dtype-aware (multiple-of-16) tiling.
    x4 = jax.random.normal(jax.random.PRNGKey(1), (40, num_feature), dtype=jnp.bfloat16)
    l4 = jax.random.randint(jax.random.PRNGKey(2), (40,), 0, num_class, dtype=jnp.int32)
    out4 = jax.block_until_ready(center_loss(x4, l4, centers, tile_b=16))
    ref4 = jax.block_until_ready(center_loss_ref(x4, l4, centers))
    assert jnp.allclose(out4, ref4, rtol=1e-5, atol=1e-6), (out4, ref4)

    print("KERNEL_OK")
</pallas_src>

<mosaic_0001>
module attributes {stable_mosaic.version = 11 : i64} {
  func.func @_center_loss_onehot_kernel(%arg0: i32, %arg1: memref<8x1xi32, #tpu.memory_space<vmem>>, %arg2: memref<8x2xf32, #tpu.memory_space<vmem>>, %arg3: memref<10x2xf32, #tpu.memory_space<vmem>>, %arg4: memref<1x1x128xf32, #tpu.memory_space<vmem>>) attributes {dimension_semantics = [#tpu.dimension_semantics<parallel>], iteration_bounds = array<i64: 1>, scalar_prefetch = 0 : i64, scratch_operands = 0 : i64, tpu.core_type = #tpu.core_type<tc>, window_params = [{transform_indices = @transform_0, window_bounds = array<i64: 8, 1>}, {transform_indices = @transform_1, window_bounds = array<i64: 8, 2>}, {pipeline_mode = #tpu.pipeline_mode<synchronous>, transform_indices = @transform_2, window_bounds = array<i64: 10, 2>}, {transform_indices = @transform_3, window_bounds = array<i64: 1, 1, 128>}]} {
    %c0 = arith.constant 0 : index
    %c0_0 = arith.constant 0 : index
    %0 = vector.load %arg2[%c0, %c0_0] : memref<8x2xf32, #tpu.memory_space<vmem>>, vector<8x2xf32>
    %c0_1 = arith.constant 0 : index
    %c0_2 = arith.constant 0 : index
    %1 = vector.load %arg3[%c0_1, %c0_2] : memref<10x2xf32, #tpu.memory_space<vmem>>, vector<10x2xf32>
    %c0_3 = arith.constant 0 : index
    %c0_4 = arith.constant 0 : index
    %2 = vector.load %arg1[%c0_3, %c0_4] : memref<8x1xi32, #tpu.memory_space<vmem>>, vector<8x1xi32>
    %3 = tpu.iota {dimensions = array<i32: 1>} : vector<8x10xi32>
    %4 = vector.broadcast %2 : vector<8x1xi32> to vector<8x10xi32>
    %5 = arith.cmpi eq, %4, %3 : vector<8x10xi32>
    %6 = arith.extui %5 : vector<8x10xi1> to vector<8x10xi32>
    %7 = arith.sitofp %6 : vector<8x10xi32> to vector<8x10xf32>
    %cst = arith.constant dense<0.000000e+00> : vector<8x2xf32>
    %8 = tpu.matmul %7, %1, %cst {dimension_numbers = #tpu.dot_dimension_numbers<[1], [0], [0], [1], [0, 0, 1, 1], [], []>} : vector<8x10xf32>, vector<10x2xf32>, vector<8x2xf32> -> vector<8x2xf32>
    %9 = arith.subf %0, %8 : vector<8x2xf32>
    %10 = arith.mulf %9, %9 : vector<8x2xf32>
    %cst_5 = arith.constant dense<0.000000e+00> : vector<8xf32>
    %11 = vector.multi_reduction <add>, %10, %cst_5 [1] : vector<8x2xf32> to vector<8xf32>
    %12 = vector.shape_cast %11 : vector<8xf32> to vector<8x1xf32>
    %cst_6 = arith.constant 9.99999996E-13 : f32
    %cst_7 = arith.constant 9.99999995E+11 : f32
    %13 = vector.broadcast %cst_6 : f32 to vector<8x1xf32>
    %14 = arith.maximumf %13, %12 : vector<8x1xf32>
    %15 = vector.broadcast %cst_7 : f32 to vector<8x1xf32>
    %16 = arith.minimumf %15, %14 : vector<8x1xf32>
    %17 = tpu.iota {dimensions = array<i32: 0>} : vector<8x1xi32>
    %c8_i32 = arith.constant 8 : i32
    %18 = arith.muli %arg0, %c8_i32 : i32
    %19 = vector.broadcast %18 : i32 to vector<8x1xi32>
    %20 = arith.addi %19, %17 : vector<8x1xi32>
    %c8_i32_8 = arith.constant 8 : i32
    %21 = vector.broadcast %c8_i32_8 : i32 to vector<8x1xi32>
    %22 = arith.cmpi slt, %20, %21 : vector<8x1xi32>
    %cst_9 = arith.constant 0.000000e+00 : f32
    %23 = vector.broadcast %cst_9 : f32 to vector<8x1xf32>
    %24 = arith.select %22, %16, %23 : vector<8x1xi1>, vector<8x1xf32>
    %25 = vector.shape_cast %24 : vector<8x1xf32> to vector<1x8x1xf32>
    %cst_10 = arith.constant dense<0.000000e+00> : vector<1xf32>
    %26 = vector.multi_reduction <add>, %25, %cst_10 [1, 2] : vector<1x8x1xf32> to vector<1xf32>
    %27 = vector.shape_cast %26 : vector<1xf32> to vector<1x1x1xf32>
    %28 = vector.extract %27[0, 0, 0] : f32 from vector<1x1x1xf32>
    %29 = vector.broadcast %28 : f32 to vector<1x1x128xf32>
    %c0_11 = arith.constant 0 : index
    %c0_12 = arith.constant 0 : index
    %c0_13 = arith.constant 0 : index
    %30 = vector.load %arg4[%c0_11, %c0_12, %c0_13] : memref<1x1x128xf32, #tpu.memory_space<vmem>>, vector<1x1x128xf32>
    tpu.vector_store %arg4[%c0_11, %c0_12, %c0_13], %29 {strides = array<i32>} : memref<1x1x128xf32, #tpu.memory_space<vmem>>, vector<1x1x128xf32>,
    return
  }
  func.func @transform_0(%arg0: i32) -> (i32, i32) {
    %c0_i32 = arith.constant 0 : i32
    %c0_i32_0 = arith.constant 0 : i32
    return %arg0, %c0_i32 : i32, i32
  }
  func.func @transform_1(%arg0: i32) -> (i32, i32) {
    %c0_i32 = arith.constant 0 : i32
    %c0_i32_0 = arith.constant 0 : i32
    return %arg0, %c0_i32 : i32, i32
  }
  func.func @transform_2(%arg0: i32) -> (i32, i32) {
    %c0_i32 = arith.constant 0 : i32
    %c0_i32_0 = arith.constant 0 : i32
    %c0_i32_1 = arith.constant 0 : i32
    return %c0_i32, %c0_i32_0 : i32, i32
  }
  func.func @transform_3(%arg0: i32) -> (i32, i32, i32) {
    %c0_i32 = arith.constant 0 : i32
    %c0_i32_0 = arith.constant 0 : i32
    %c0_i32_1 = arith.constant 0 : i32
    return %arg0, %c0_i32, %c0_i32_0 : i32, i32, i32
  }
}

</mosaic_0001>

<llo_original>
// kernel: tpu_custom_call.1
$region0: #{tpu_custom_call.1}
  #allocation0 [shape = 'u32[]', space=smem, size = 0x4, offset = 0x4, fixed_abs, tag = 'smem constant byte address 0x4 - core index']
  #allocation1 [shape = 'u32[144,128]{1,0:T(1,128)}', space=vmem, size = 0x12000, scoped, tag = 'internal scratch']
  %s0 = inlined_call_operand.vmem [shape: s32[8,1], index: 0, kind: input, shape index: {}]
  %s1 = inlined_call_operand.vmem [shape: f32[8,2], index: 1, kind: input, shape index: {}]
  %s2 = inlined_call_operand.vmem [shape: f32[10,2], index: 2, kind: input, shape index: {}]
  %s3 = inlined_call_operand.hbm [shape: f32[1,1,128], index: 3, kind: output, shape index: {}]
  %s4 = sld [smem:[#allocation0]]
  $region22: #{tpu_custom_call.1} parent=0
    _
  %s6 = ssub.s32 1, %s4
  %s7 = scalar_select 0, %s6, %s4
  $region1: #{tpu_custom_call.1} parent=0
    #allocation2 [shape = 'u8[512]{0}', space=vmem, size = 0x400, scoped, tag = 'output window, operand 0, single buffered']
    #allocation3 [shape = 's32[1]{0}', space=sflag, size = 0x4, scoped, tag = 'scoped memory for tpu_custom_call.1']
    %8 = vsyncpa [#allocation3], 0
    // Predicated region
    $region2: #{tpu_custom_call.1} parent=1 // pred_check
      _
    $region3: #{tpu_custom_call.1} parent=1 // pred_check_branch
      %10 = sbr.rel (0) target = $region5
    $region4: #{tpu_custom_call.1} parent=1 // pred_region
      _
    $region5: #{tpu_custom_call.1} parent=1 // pred_fallthru
      _
    // Predicated region
    $region6: #{tpu_custom_call.1} parent=1 // pred_check
      _
    $region7: #{tpu_custom_call.1} parent=1 // pred_check_branch
      %12 = sbr.rel (0) target = $region9
    $region8: #{tpu_custom_call.1} parent=1 // pred_region
      _
    $region9: #{tpu_custom_call.1} parent=1 // pred_fallthru
      _
    // Predicated region
    $region10: #{tpu_custom_call.1} parent=1 // pred_check
      _
    $region11: #{tpu_custom_call.1} parent=1 // pred_check_branch
      %14 = sbr.rel (0) target = $region13
    $region12: #{tpu_custom_call.1} parent=1 // pred_region
      _
    $region13: #{tpu_custom_call.1} parent=1 // pred_fallthru
      _
    %v15 = vld [vmem:[%s1] sm:$0xff]
    %v16 = vld [vmem:[%s2] sm:$0xff]
    %v17 = vld [vmem:[%s2 + $0x8] sm:$0x3]
    %v18 = vld [vmem:[%s0] sm:$0xff]
    %v19 = vlaneseq
    %v20 = vand.u32 %v19, 127
    %21 = vset.pattern.permute.xlu0 0
    %22 = vperm.xlu0 %21, %v18
    %v23 = vpop.permute.xlu0 %22
    %vm24 = vcmp.eq.s32.totalorder %v23, %v20
    %v25 = vsel %vm24, 1, 0
    %v26 = vcvt.s32.f32 %v25
    %vm27 = vcmask 80896
    %v29 = vsel %vm27, %v26, 0
    %vm31 = vcmask 1041408
    %v33 = vsel %vm31, %v17, 0
    %35 = vmatprep.subr.mxu0 0.0
    %36 = vmatpush1.msra.mxu0 %v16
    %37 = vmatprep.subr.mxu0 0.0
    %38 = vmatpush1.msra.mxu0 %v33
    %39 = vmatprep.subr.mxu0 0.0
    %40 = vmatpush1.msra.mxu0 0.0
    %41 = vmatprep.subr.mxu0 0.0
    %42 = vmatpush1.msra.mxu0 0.0
    %43 = vmatprep.subr.mxu0 0.0
    %44 = vmatpush1.msra.mxu0 0.0
    %45 = vmatprep.subr.mxu0 0.0
    %46 = vmatpush1.msra.mxu0 0.0
    %47 = vmatprep.subr.mxu0 0.0
    %48 = vmatpush1.msra.mxu0 0.0
    %49 = vmatprep.subr.mxu0 0.0
    %50 = vmatpush1.msra.mxu0 0.0
    %51 = vmatprep.subr.mxu0 0.0
    %52 = vmatpush1.msra.mxu0 0.0
    %53 = vmatprep.subr.mxu0 0.0
    %54 = vmatpush1.msra.mxu0 0.0
    %55 = vmatprep.subr.mxu0 0.0
    %56 = vmatpush1.msra.mxu0 0.0
    %57 = vmatprep.subr.mxu0 0.0
    %58 = vmatpush1.msra.mxu0 0.0
    %59 = vmatprep.subr.mxu0 0.0
    %60 = vmatpush1.msra.mxu0 0.0
    %61 = vmatprep.subr.mxu0 0.0
    %62 = vmatpush1.msra.mxu0 0.0
    %63 = vmatprep.subr.mxu0 0.0
    %64 = vmatpush1.msra.mxu0 0.0
    %65 = vmatprep.subr.mxu0 0.0
    %66 = vmatpush1.msra.mxu0 0.0
    %67 = vmatprep.subr.mxu0 0.0
    %68 = vmatpush1.msra.mxu0 0.0
    %69 = vmatprep.subr.mxu0 0.0
    %70 = vmatpush1.msra.mxu0 0.0
    %71 = vmatprep.subr.mxu0 0.0
    %72 = vmatpush1.msra.mxu0 0.0
    %73 = vmatprep.subr.mxu0 0.0
    %74 = vmatpush1.msra.mxu0 0.0
    %75 = vmatprep.subr.mxu0 0.0
    %76 = vmatpush1.msra.mxu0 0.0
    %77 = vmatprep.subr.mxu0 0.0
    %78 = vmatpush1.msra.mxu0 0.0
    %79 = vmatprep.subr.mxu0 0.0
    %80 = vmatpush1.msra.mxu0 0.0
    %81 = vmatprep.subr.mxu0 0.0
    %82 = vmatpush1.msra.mxu0 0.0
    %83 = vmatprep.subr.mxu0 0.0
    %84 = vmatpush1.msra.mxu0 0.0
    %85 = vmatprep.subr.mxu0 0.0
    %86 = vmatpush1.msra.mxu0 0.0
    %87 = vmatprep.subr.mxu0 0.0
    %88 = vmatpush1.msra.mxu0 0.0
    %89 = vmatprep.subr.mxu0 0.0
    %90 = vmatpush1.msra.mxu0 0.0
    %91 = vmatprep.subr.mxu0 0.0
    %92 = vmatpush1.msra.mxu0 0.0
    %93 = vmatprep.subr.mxu0 0.0
    %94 = vmatpush1.msra.mxu0 0.0
    %95 = vmatprep.subr.mxu0 0.0
    %96 = vmatpush1.msra.mxu0 0.0
    %97 = vmatprep.subr.mxu0 0.0
    %98 = vmatpush1.msra.mxu0 0.0
    %99 = vmatprep.mubr.f32.mxu0 0.0
    %100 = vmatmul.mubr.f32.gmra.mrb[0].mxu0 %v29
    %v101 = vpop.f32.mrb[0].mxu0
    %v102 = vadd.f32 0.0, %v101
    %v103 = vpop.f32.mrb[0].mxu0
    %104 = vdwg.mxu0
    %v105 = vsub.f32 %v15, %v102
    %v106 = vmul.f32 %v105, %v105
    %vm107 = vcmask 15360
    %v108 = vsel %vm107, %v106, 0.0
    %109 = vadd.xlane.f32.xlu0 %v108
    %v110 = vpop.xlane.xlu0 %109
    %v111 = vmax.f32 %v110, 1e-12
    %v112 = vmin.f32 %v111, 1e+12
    %v113 = vlaneseq
    %v114 = vshrl.u32 %v113, 7
    %s115 = smul.u32 0, 8
    %v116 = vstv %s115
    %v117 = vadd.s32 %v116, %v114
    %vm118 = vcmp.lt.s32.totalorder %v117, 8
    %v119 = vsel %vm118, %v112, 0.0
    %vm120 = vcmask 7168
    %v121 = vsel %vm120, %v119, 0.0
    %122 = vadd.xlane.f32.xlu0 %v121
    %v123 = vpop.xlane.xlu0 %122
    %v124 = vrot.slane %v123, 4
    %v125 = vadd.f32 %v123, %v124
    %v126 = vrot.slane %v125, 2
    %v127 = vadd.f32 %v125, %v126
    %v128 = vrot.slane %v127, 1
    %v129 = vadd.f32 %v127, %v128
    %s130 = vtos %v129
    %v131 = vstv %s130
    %132 = vst [vmem:[#allocation2] sm:$0x1] %v131
    // Predicated region
    $region14: #{tpu_custom_call.1} parent=1 // pred_check
      _
    $region15: #{tpu_custom_call.1} parent=1 // pred_check_branch
      %134 = sbr.rel (0) target = $region17
    $region16: #{tpu_custom_call.1} parent=1 // pred_region
      %s136 = ssub.s32 16, 16
      %137 = vsyncadd [#allocation3], %s136
      %s139 = sshll.u32 [#allocation2], 4
      %s140 = int_to_ptr.vmem [resolvable:$true] %s139
      %142 = dma.vmem_to_hbm [thread:$0]  %s140, 16, %s3, [#allocation3]
    $region17: #{tpu_custom_call.1} parent=1 // pred_fallthru
      _
    // Predicated region
    $region18: #{tpu_custom_call.1} parent=1 // pred_check
      _
    $region19: #{tpu_custom_call.1} parent=1 // pred_check_branch
      %144 = sbr.rel (0) target = $region21
    $region20: #{tpu_custom_call.1} parent=1 // pred_region
      %145 = dma.done [#allocation3], 16
    $region21: #{tpu_custom_call.1} parent=1 // pred_fallthru
      _
    %146 = vsyncpa [#allocation3], 1

</llo_original>
